<compile_context>
chip_gen: v6e
topology: v6e:2x2x1
jax: 0.10.0
libtpu: 0.0.40
codegen_flags: <defaults>
</compile_context>

<pallas_src>
import functools

import jax
import jax.numpy as jnp
from jax import lax
from jax.experimental import pallas as pl
from jax.experimental.pallas import tpu as pltpu

LANE = 128
_EPS = 1e-5
_SLOPE = 0.01


def _round_up(x, m):
    return (x + m - 1) // m * m


# ----------------------------------------------------------------------------- kernel
def _ln_leaky(h, gamma, beta):
    """LayerNorm(eps=1e-5) + LeakyReLU(0.01), all in f32.

    Both reductions (sum(x), sum(x*x)) are issued back-to-back with no serial
    dependency so the XLU ops can overlap; the divide-by-D is a compile-time
    constant multiply; rsqrt goes to the EUP slot.
    """
    inv_d = jnp.float32(1.0 / h.shape[-1])
    s1 = jnp.sum(h, axis=-1, keepdims=True)
    s2 = jnp.sum(h * h, axis=-1, keepdims=True)
    mu = s1 * inv_d
    var = s2 * inv_d - mu * mu
    y = (h - mu) * lax.rsqrt(var + _EPS) * gamma + beta
    return jnp.where(y > 0, y, _SLOPE * y)


def _qnet_kernel(x_ref, w1_ref, w2_ref, w3_ref, w4_ref, aff_ref, b4_ref, out_ref):
    # aff rows: [b1, g1, be1, b2, g2, be2, b3, g3, be3]  (f32)
    aff = aff_ref[...]
    x = x_ref[...].astype(jnp.bfloat16)

    h = jnp.dot(x, w1_ref[...], preferred_element_type=jnp.float32) + aff[0:1]
    h = _ln_leaky(h, aff[1:2], aff[2:3])

    h = jnp.dot(h.astype(jnp.bfloat16), w2_ref[...],
                preferred_element_type=jnp.float32) + aff[3:4]
    h = _ln_leaky(h, aff[4:5], aff[5:6])

    h = jnp.dot(h.astype(jnp.bfloat16), w3_ref[...],
                preferred_element_type=jnp.float32) + aff[6:7]
    h = _ln_leaky(h, aff[7:8], aff[8:9])

    # Both heads (delay, fair) fused into one lane-dense matmul; columns beyond
    # 2*output_dim are exact zeros and are sliced off in the wrapper.
    out = jnp.dot(h.astype(jnp.bfloat16), w4_ref[...],
                  preferred_element_type=jnp.float32) + b4_ref[...]
    out_ref[...] = out.astype(out_ref.dtype)


# ----------------------------------------------------------------------------- packing
def pack_params(p, input_dim, output_dim, hidden_dim=128):
    """Pad / pack / cast raw params (weights stored as (in, out) = W^T of PyTorch)."""
    assert hidden_dim % LANE == 0, "hidden_dim must be a multiple of 128"
    in_pad = _round_up(input_dim, LANE)
    out_pad = _round_up(2 * output_dim, LANE)

    w1 = jnp.zeros((in_pad, hidden_dim), jnp.float32).at[:input_dim].set(p["w1"])

    w4 = jnp.zeros((hidden_dim, out_pad), jnp.float32)
    w4 = w4.at[:, :output_dim].set(p["w4_delay"])
    w4 = w4.at[:, output_dim:2 * output_dim].set(p["w4_fair"])
    b4 = jnp.zeros((1, out_pad), jnp.float32)
    b4 = b4.at[0, :output_dim].set(p["b4_delay"])
    b4 = b4.at[0, output_dim:2 * output_dim].set(p["b4_fair"])

    affine = jnp.stack([p["b1"], p["g1"], p["be1"],
                        p["b2"], p["g2"], p["be2"],
                        p["b3"], p["g3"], p["be3"]], axis=0).astype(jnp.float32)

    return {
        "w1": w1.astype(jnp.bfloat16),
        "w2": p["w2"].astype(jnp.bfloat16),
        "w3": p["w3"].astype(jnp.bfloat16),
        "w4": w4.astype(jnp.bfloat16),
        "affine": affine,      # (9, hidden) f32
        "b4": b4,              # (1, out_pad) f32
    }


# ----------------------------------------------------------------------------- wrapper
@functools.partial(jax.jit, static_argnames=("output_dim", "tile_b"))
def qnetwork_forward(state, packed, *, output_dim, tile_b=256):
    """state: (B, input_dim) f32. Returns (q_delay, q_fair), each (B, output_dim) f32."""
    B, input_dim = state.shape
    in_pad = packed["w1"].shape[0]
    hidden = packed["w2"].shape[0]
    out_pad = packed["w4"].shape[1]

    # Batch tiling: at most `tile_b` rows per grid step (rows padded to x8).
    tb = min(tile_b, _round_up(B, 8))
    n_tiles = pl.cdiv(B, tb)
    b_pad = n_tiles * tb

    x = jnp.zeros((b_pad, in_pad), jnp.float32).at[:B, :input_dim].set(state)

    flops = 2 * b_pad * hidden * (in_pad + 2 * hidden + out_pad)
    bytes_accessed = (
        x.size * 4 + b_pad * out_pad * 4
        + (packed["w1"].size + packed["w2"].size
           + packed["w3"].size + packed["w4"].size) * 2
        + packed["affine"].size * 4 + packed["b4"].size * 4)

    out = pl.pallas_call(
        _qnet_kernel,
        out_shape=jax.ShapeDtypeStruct((b_pad, out_pad), jnp.float32),
        grid=(n_tiles,),
        in_specs=[
            pl.BlockSpec((tb, in_pad), lambda i: (i, 0)),       # x: tiled over batch
            pl.BlockSpec((in_pad, hidden), lambda i: (0, 0)),   # w1 (VMEM-resident)
            pl.BlockSpec((hidden, hidden), lambda i: (0, 0)),   # w2
            pl.BlockSpec((hidden, hidden), lambda i: (0, 0)),   # w3
            pl.BlockSpec((hidden, out_pad), lambda i: (0, 0)),  # w4 (both heads)
            pl.BlockSpec((9, hidden), lambda i: (0, 0)),        # packed bias/gamma/beta
            pl.BlockSpec((1, out_pad), lambda i: (0, 0)),       # b4 (both heads)
        ],
        out_specs=pl.BlockSpec((tb, out_pad), lambda i: (i, 0)),
        compiler_params=pltpu.CompilerParams(
            dimension_semantics=("parallel",)),
        cost_estimate=pl.CostEstimate(
            flops=flops, transcendentals=3 * b_pad, bytes_accessed=bytes_accessed),
    )(x, packed["w1"], packed["w2"], packed["w3"], packed["w4"],
      packed["affine"], packed["b4"])

    q = out[:B]
    return q[:, :output_dim], q[:, output_dim:2 * output_dim]


# ----------------------------------------------------------------------------- init / reference
def init_params(key, input_dim, output_dim, hidden_dim=128):
    """PyTorch nn.Linear-style init (U[-1/sqrt(fan_in), +]); weights stored (in, out)."""
    def linear(k, fan_in, fan_out):
        kw, kb = jax.random.split(k)
        bound = 1.0 / jnp.sqrt(jnp.float32(fan_in))
        w = jax.random.uniform(kw, (fan_in, fan_out), jnp.float32, -bound, bound)
        b = jax.random.uniform(kb, (fan_out,), jnp.float32, -bound, bound)
        return w, b

    k1, k2, k3, k4, k5 = jax.random.split(key, 5)
    w1, b1 = linear(k1, input_dim, hidden_dim)
    w2, b2 = linear(k2, hidden_dim, hidden_dim)
    w3, b3 = linear(k3, hidden_dim, hidden_dim)
    w4d, b4d = linear(k4, hidden_dim, output_dim)
    w4f, b4f = linear(k5, hidden_dim, output_dim)
    ones = jnp.ones((hidden_dim,), jnp.float32)
    zeros = jnp.zeros((hidden_dim,), jnp.float32)
    return {
        "w1": w1, "b1": b1, "g1": ones, "be1": zeros,
        "w2": w2, "b2": b2, "g2": ones, "be2": zeros,
        "w3": w3, "b3": b3, "g3": ones, "be3": zeros,
        "w4_delay": w4d, "b4_delay": b4d,
        "w4_fair": w4f, "b4_fair": b4f,
    }


def _layernorm_ref(x, gamma, beta, eps=_EPS):
    mu = jnp.mean(x, axis=-1, keepdims=True)
    var = jnp.mean((x - mu) ** 2, axis=-1, keepdims=True)
    return (x - mu) * lax.rsqrt(var + eps) * gamma + beta


def _leaky_ref(x):
    return jnp.where(x > 0, x, _SLOPE * x)


def reference_forward(state, p):
    """Pure-JAX reference with PyTorch semantics; matmuls mirror the kernel's
    bf16-operand / f32-accumulate precision so the tolerance can stay tight."""
    def mm(a, w):
        return jnp.dot(a.astype(jnp.bfloat16), w.astype(jnp.bfloat16),
                       preferred_element_type=jnp.float32)

    h = _leaky_ref(_layernorm_ref(mm(state, p["w1"]) + p["b1"], p["g1"], p["be1"]))
    h = _leaky_ref(_layernorm_ref(mm(h, p["w2"]) + p["b2"], p["g2"], p["be2"]))
    h = _leaky_ref(_layernorm_ref(mm(h, p["w3"]) + p["b3"], p["g3"], p["be3"]))
    q_delay = mm(h, p["w4_delay"]) + p["b4_delay"]
    q_fair = mm(h, p["w4_fair"]) + p["b4_fair"]
    return q_delay, q_fair


# ----------------------------------------------------------------------------- demo
if __name__ == "__main__":
    input_dim, output_dim, hidden_dim = 32, 8, 128
    batch = 8

    key = jax.random.PRNGKey(0)
    k_params, k_state = jax.random.split(key)
    raw = init_params(k_params, input_dim, output_dim, hidden_dim)
    packed = pack_params(raw, input_dim, output_dim, hidden_dim)
    state = jax.random.normal(k_state, (batch, input_dim), jnp.float32)

    q_delay, q_fair = qnetwork_forward(state, packed, output_dim=output_dim)
    q_delay, q_fair = jax.block_until_ready((q_delay, q_fair))

    ref_delay, ref_fair = reference_forward(state, raw)
    assert q_delay.shape == (batch, output_dim)
    assert q_fair.shape == (batch, output_dim)
    # bf16-weight quantization is intentional (perf review); reference uses the
    # same matmul precision, so only LN-formula / reduction-order noise remains.
    assert jnp.allclose(q_delay, ref_delay, atol=2e-3, rtol=2e-3)
    assert jnp.allclose(q_fair, ref_fair, atol=2e-3, rtol=2e-3)
    print("KERNEL_OK")
</pallas_src>

<mosaic_0001>
module attributes {stable_mosaic.version = 11 : i64} {
  func.func @_qnet_kernel(%arg0: i32, %arg1: memref<8x128xf32, #tpu.memory_space<vmem>>, %arg2: memref<128x128xbf16, #tpu.memory_space<vmem>>, %arg3: memref<128x128xbf16, #tpu.memory_space<vmem>>, %arg4: memref<128x128xbf16, #tpu.memory_space<vmem>>, %arg5: memref<128x128xbf16, #tpu.memory_space<vmem>>, %arg6: memref<9x128xf32, #tpu.memory_space<vmem>>, %arg7: memref<1x128xf32, #tpu.memory_space<vmem>>, %arg8: memref<8x128xf32, #tpu.memory_space<vmem>>) attributes {dimension_semantics = [#tpu.dimension_semantics<parallel>], iteration_bounds = array<i64: 1>, scalar_prefetch = 0 : i64, scratch_operands = 0 : i64, tpu.core_type = #tpu.core_type<tc>, window_params = [{transform_indices = @transform_0, window_bounds = array<i64: 8, 128>}, {pipeline_mode = #tpu.pipeline_mode<synchronous>, transform_indices = @transform_1, window_bounds = array<i64: 128, 128>}, {pipeline_mode = #tpu.pipeline_mode<synchronous>, transform_indices = @transform_2, window_bounds = array<i64: 128, 128>}, {pipeline_mode = #tpu.pipeline_mode<synchronous>, transform_indices = @transform_3, window_bounds = array<i64: 128, 128>}, {pipeline_mode = #tpu.pipeline_mode<synchronous>, transform_indices = @transform_4, window_bounds = array<i64: 128, 128>}, {pipeline_mode = #tpu.pipeline_mode<synchronous>, transform_indices = @transform_5, window_bounds = array<i64: 9, 128>}, {pipeline_mode = #tpu.pipeline_mode<synchronous>, transform_indices = @transform_6, window_bounds = array<i64: 1, 128>}, {transform_indices = @transform_7, window_bounds = array<i64: 8, 128>}]} {
    %c0 = arith.constant 0 : index
    %c0_0 = arith.constant 0 : index
    %0 = vector.load %arg6[%c0, %c0_0] : memref<9x128xf32, #tpu.memory_space<vmem>>, vector<9x128xf32>
    %c0_1 = arith.constant 0 : index
    %c0_2 = arith.constant 0 : index
    %1 = vector.load %arg1[%c0_1, %c0_2] : memref<8x128xf32, #tpu.memory_space<vmem>>, vector<8x128xf32>
    %2 = arith.truncf %1 : vector<8x128xf32> to vector<8x128xbf16>
    %c0_3 = arith.constant 0 : index
    %c0_4 = arith.constant 0 : index
    %3 = vector.load %arg2[%c0_3, %c0_4] : memref<128x128xbf16, #tpu.memory_space<vmem>>, vector<128x128xbf16>
    %cst = arith.constant dense<0.000000e+00> : vector<8x128xf32>
    %4 = tpu.matmul %2, %3, %cst {dimension_numbers = #tpu.dot_dimension_numbers<[1], [0], [0], [1], [0, 0, 1, 1], [], []>} : vector<8x128xbf16>, vector<128x128xbf16>, vector<8x128xf32> -> vector<8x128xf32>
    %5 = vector.extract_strided_slice %0 {offsets = [0, 0], sizes = [1, 128], strides = [1, 1]} : vector<9x128xf32> to vector<1x128xf32>
    %6 = vector.broadcast %5 : vector<1x128xf32> to vector<8x128xf32>
    %7 = arith.addf %4, %6 : vector<8x128xf32>
    %8 = vector.extract_strided_slice %0 {offsets = [1, 0], sizes = [1, 128], strides = [1, 1]} : vector<9x128xf32> to vector<1x128xf32>
    %9 = vector.extract_strided_slice %0 {offsets = [2, 0], sizes = [1, 128], strides = [1, 1]} : vector<9x128xf32> to vector<1x128xf32>
    %cst_5 = arith.constant dense<0.000000e+00> : vector<8xf32>
    %10 = vector.multi_reduction <add>, %7, %cst_5 [1] : vector<8x128xf32> to vector<8xf32>
    %11 = vector.shape_cast %10 : vector<8xf32> to vector<8x1xf32>
    %12 = arith.mulf %7, %7 : vector<8x128xf32>
    %cst_6 = arith.constant dense<0.000000e+00> : vector<8xf32>
    %13 = vector.multi_reduction <add>, %12, %cst_6 [1] : vector<8x128xf32> to vector<8xf32>
    %14 = vector.shape_cast %13 : vector<8xf32> to vector<8x1xf32>
    %cst_7 = arith.constant 7.812500e-03 : f32
    %15 = vector.broadcast %cst_7 : f32 to vector<8x1xf32>
    %16 = arith.mulf %11, %15 : vector<8x1xf32>
    %cst_8 = arith.constant 7.812500e-03 : f32
    %17 = vector.broadcast %cst_8 : f32 to vector<8x1xf32>
    %18 = arith.mulf %14, %17 : vector<8x1xf32>
    %19 = arith.mulf %16, %16 : vector<8x1xf32>
    %20 = arith.subf %18, %19 : vector<8x1xf32>
    %21 = vector.broadcast %16 : vector<8x1xf32> to vector<8x128xf32>
    %22 = arith.subf %7, %21 : vector<8x128xf32>
    %cst_9 = arith.constant 9.99999974E-6 : f32
    %23 = vector.broadcast %cst_9 : f32 to vector<8x1xf32>
    %24 = arith.addf %20, %23 : vector<8x1xf32>
    %25 = math.rsqrt %24 : vector<8x1xf32>
    %26 = vector.broadcast %25 : vector<8x1xf32> to vector<8x128xf32>
    %27 = arith.mulf %22, %26 : vector<8x128xf32>
    %28 = vector.broadcast %8 : vector<1x128xf32> to vector<8x128xf32>
    %29 = arith.mulf %27, %28 : vector<8x128xf32>
    %30 = vector.broadcast %9 : vector<1x128xf32> to vector<8x128xf32>
    %31 = arith.addf %29, %30 : vector<8x128xf32>
    %cst_10 = arith.constant 0.000000e+00 : f32
    %32 = vector.broadcast %cst_10 : f32 to vector<8x128xf32>
    %33 = arith.cmpf ogt, %31, %32 : vector<8x128xf32>
    %cst_11 = arith.constant 0.00999999977 : f32
    %34 = vector.broadcast %cst_11 : f32 to vector<8x128xf32>
    %35 = arith.mulf %34, %31 : vector<8x128xf32>
    %36 = arith.select %33, %31, %35 : vector<8x128xi1>, vector<8x128xf32>
    %37 = arith.truncf %36 : vector<8x128xf32> to vector<8x128xbf16>
    %c0_12 = arith.constant 0 : index
    %c0_13 = arith.constant 0 : index
    %38 = vector.load %arg3[%c0_12, %c0_13] : memref<128x128xbf16, #tpu.memory_space<vmem>>, vector<128x128xbf16>
    %cst_14 = arith.constant dense<0.000000e+00> : vector<8x128xf32>
    %39 = tpu.matmul %37, %38, %cst_14 {dimension_numbers = #tpu.dot_dimension_numbers<[1], [0], [0], [1], [0, 0, 1, 1], [], []>} : vector<8x128xbf16>, vector<128x128xbf16>, vector<8x128xf32> -> vector<8x128xf32>
    %40 = vector.extract_strided_slice %0 {offsets = [3, 0], sizes = [1, 128], strides = [1, 1]} : vector<9x128xf32> to vector<1x128xf32>
    %41 = vector.broadcast %40 : vector<1x128xf32> to vector<8x128xf32>
    %42 = arith.addf %39, %41 : vector<8x128xf32>
    %43 = vector.extract_strided_slice %0 {offsets = [4, 0], sizes = [1, 128], strides = [1, 1]} : vector<9x128xf32> to vector<1x128xf32>
    %44 = vector.extract_strided_slice %0 {offsets = [5, 0], sizes = [1, 128], strides = [1, 1]} : vector<9x128xf32> to vector<1x128xf32>
    %cst_15 = arith.constant dense<0.000000e+00> : vector<8xf32>
    %45 = vector.multi_reduction <add>, %42, %cst_15 [1] : vector<8x128xf32> to vector<8xf32>
    %46 = vector.shape_cast %45 : vector<8xf32> to vector<8x1xf32>
    %47 = arith.mulf %42, %42 : vector<8x128xf32>
    %cst_16 = arith.constant dense<0.000000e+00> : vector<8xf32>
    %48 = vector.multi_reduction <add>, %47, %cst_16 [1] : vector<8x128xf32> to vector<8xf32>
    %49 = vector.shape_cast %48 : vector<8xf32> to vector<8x1xf32>
    %cst_17 = arith.constant 7.812500e-03 : f32
    %50 = vector.broadcast %cst_17 : f32 to vector<8x1xf32>
    %51 = arith.mulf %46, %50 : vector<8x1xf32>
    %cst_18 = arith.constant 7.812500e-03 : f32
    %52 = vector.broadcast %cst_18 : f32 to vector<8x1xf32>
    %53 = arith.mulf %49, %52 : vector<8x1xf32>
    %54 = arith.mulf %51, %51 : vector<8x1xf32>
    %55 = arith.subf %53, %54 : vector<8x1xf32>
    %56 = vector.broadcast %51 : vector<8x1xf32> to vector<8x128xf32>
    %57 = arith.subf %42, %56 : vector<8x128xf32>
    %cst_19 = arith.constant 9.99999974E-6 : f32
    %58 = vector.broadcast %cst_19 : f32 to vector<8x1xf32>
    %59 = arith.addf %55, %58 : vector<8x1xf32>
    %60 = math.rsqrt %59 : vector<8x1xf32>
    %61 = vector.broadcast %60 : vector<8x1xf32> to vector<8x128xf32>
    %62 = arith.mulf %57, %61 : vector<8x128xf32>
    %63 = vector.broadcast %43 : vector<1x128xf32> to vector<8x128xf32>
    %64 = arith.mulf %62, %63 : vector<8x128xf32>
    %65 = vector.broadcast %44 : vector<1x128xf32> to vector<8x128xf32>
    %66 = arith.addf %64, %65 : vector<8x128xf32>
    %cst_20 = arith.constant 0.000000e+00 : f32
    %67 = vector.broadcast %cst_20 : f32 to vector<8x128xf32>
    %68 = arith.cmpf ogt, %66, %67 : vector<8x128xf32>
    %cst_21 = arith.constant 0.00999999977 : f32
    %69 = vector.broadcast %cst_21 : f32 to vector<8x128xf32>
    %70 = arith.mulf %69, %66 : vector<8x128xf32>
    %71 = arith.select %68, %66, %70 : vector<8x128xi1>, vector<8x128xf32>
    %72 = arith.truncf %71 : vector<8x128xf32> to vector<8x128xbf16>
    %c0_22 = arith.constant 0 : index
    %c0_23 = arith.constant 0 : index
    %73 = vector.load %arg4[%c0_22, %c0_23] : memref<128x128xbf16, #tpu.memory_space<vmem>>, vector<128x128xbf16>
    %cst_24 = arith.constant dense<0.000000e+00> : vector<8x128xf32>
    %74 = tpu.matmul %72, %73, %cst_24 {dimension_numbers = #tpu.dot_dimension_numbers<[1], [0], [0], [1], [0, 0, 1, 1], [], []>} : vector<8x128xbf16>, vector<128x128xbf16>, vector<8x128xf32> -> vector<8x128xf32>
    %75 = vector.extract_strided_slice %0 {offsets = [6, 0], sizes = [1, 128], strides = [1, 1]} : vector<9x128xf32> to vector<1x128xf32>
    %76 = vector.broadcast %75 : vector<1x128xf32> to vector<8x128xf32>
    %77 = arith.addf %74, %76 : vector<8x128xf32>
    %78 = vector.extract_strided_slice %0 {offsets = [7, 0], sizes = [1, 128], strides = [1, 1]} : vector<9x128xf32> to vector<1x128xf32>
    %79 = vector.extract_strided_slice %0 {offsets = [8, 0], sizes = [1, 128], strides = [1, 1]} : vector<9x128xf32> to vector<1x128xf32>
    %cst_25 = arith.constant dense<0.000000e+00> : vector<8xf32>
    %80 = vector.multi_reduction <add>, %77, %cst_25 [1] : vector<8x128xf32> to vector<8xf32>
    %81 = vector.shape_cast %80 : vector<8xf32> to vector<8x1xf32>
    %82 = arith.mulf %77, %77 : vector<8x128xf32>
    %cst_26 = arith.constant dense<0.000000e+00> : vector<8xf32>
    %83 = vector.multi_reduction <add>, %82, %cst_26 [1] : vector<8x128xf32> to vector<8xf32>
    %84 = vector.shape_cast %83 : vector<8xf32> to vector<8x1xf32>
    %cst_27 = arith.constant 7.812500e-03 : f32
    %85 = vector.broadcast %cst_27 : f32 to vector<8x1xf32>
    %86 = arith.mulf %81, %85 : vector<8x1xf32>
    %cst_28 = arith.constant 7.812500e-03 : f32
    %87 = vector.broadcast %cst_28 : f32 to vector<8x1xf32>
    %88 = arith.mulf %84, %87 : vector<8x1xf32>
    %89 = arith.mulf %86, %86 : vector<8x1xf32>
    %90 = arith.subf %88, %89 : vector<8x1xf32>
    %91 = vector.broadcast %86 : vector<8x1xf32> to vector<8x128xf32>
    %92 = arith.subf %77, %91 : vector<8x128xf32>
    %cst_29 = arith.constant 9.99999974E-6 : f32
    %93 = vector.broadcast %cst_29 : f32 to vector<8x1xf32>
    %94 = arith.addf %90, %93 : vector<8x1xf32>
    %95 = math.rsqrt %94 : vector<8x1xf32>
    %96 = vector.broadcast %95 : vector<8x1xf32> to vector<8x128xf32>
    %97 = arith.mulf %92, %96 : vector<8x128xf32>
    %98 = vector.broadcast %78 : vector<1x128xf32> to vector<8x128xf32>
    %99 = arith.mulf %97, %98 : vector<8x128xf32>
    %100 = vector.broadcast %79 : vector<1x128xf32> to vector<8x128xf32>
    %101 = arith.addf %99, %100 : vector<8x128xf32>
    %cst_30 = arith.constant 0.000000e+00 : f32
    %102 = vector.broadcast %cst_30 : f32 to vector<8x128xf32>
    %103 = arith.cmpf ogt, %101, %102 : vector<8x128xf32>
    %cst_31 = arith.constant 0.00999999977 : f32
    %104 = vector.broadcast %cst_31 : f32 to vector<8x128xf32>
    %105 = arith.mulf %104, %101 : vector<8x128xf32>
    %106 = arith.select %103, %101, %105 : vector<8x128xi1>, vector<8x128xf32>
    %107 = arith.truncf %106 : vector<8x128xf32> to vector<8x128xbf16>
    %c0_32 = arith.constant 0 : index
    %c0_33 = arith.constant 0 : index
    %108 = vector.load %arg5[%c0_32, %c0_33] : memref<128x128xbf16, #tpu.memory_space<vmem>>, vector<128x128xbf16>
    %cst_34 = arith.constant dense<0.000000e+00> : vector<8x128xf32>
    %109 = tpu.matmul %107, %108, %cst_34 {dimension_numbers = #tpu.dot_dimension_numbers<[1], [0], [0], [1], [0, 0, 1, 1], [], []>} : vector<8x128xbf16>, vector<128x128xbf16>, vector<8x128xf32> -> vector<8x128xf32>
    %c0_35 = arith.constant 0 : index
    %c0_36 = arith.constant 0 : index
    %110 = vector.load %arg7[%c0_35, %c0_36] : memref<1x128xf32, #tpu.memory_space<vmem>>, vector<1x128xf32>
    %111 = vector.broadcast %110 : vector<1x128xf32> to vector<8x128xf32>
    %112 = arith.addf %109, %111 : vector<8x128xf32>
    %c0_37 = arith.constant 0 : index
    %c0_38 = arith.constant 0 : index
    %113 = vector.load %arg8[%c0_37, %c0_38] : memref<8x128xf32, #tpu.memory_space<vmem>>, vector<8x128xf32>
    tpu.vector_store %arg8[%c0_37, %c0_38], %112 {strides = array<i32>} : memref<8x128xf32, #tpu.memory_space<vmem>>, vector<8x128xf32>,
    return
  }
  func.func @transform_0(%arg0: i32) -> (i32, i32) {
    %c0_i32 = arith.constant 0 : i32
    %c0_i32_0 = arith.constant 0 : i32
    return %arg0, %c0_i32 : i32, i32
  }
  func.func @transform_1(%arg0: i32) -> (i32, i32) {
    %c0_i32 = arith.constant 0 : i32
    %c0_i32_0 = arith.constant 0 : i32
    %c0_i32_1 = arith.constant 0 : i32
    return %c0_i32, %c0_i32_0 : i32, i32
  }
  func.func @transform_2(%arg0: i32) -> (i32, i32) {
    %c0_i32 = arith.constant 0 : i32
    %c0_i32_0 = arith.constant 0 : i32
    %c0_i32_1 = arith.constant 0 : i32
    return %c0_i32, %c0_i32_0 : i32, i32
  }
  func.func @transform_3(%arg0: i32) -> (i32, i32) {
    %c0_i32 = arith.constant 0 : i32
    %c0_i32_0 = arith.constant 0 : i32
    %c0_i32_1 = arith.constant 0 : i32
    return %c0_i32, %c0_i32_0 : i32, i32
  }
  func.func @transform_4(%arg0: i32) -> (i32, i32) {
    %c0_i32 = arith.constant 0 : i32
    %c0_i32_0 = arith.constant 0 : i32
    %c0_i32_1 = arith.constant 0 : i32
    return %c0_i32, %c0_i32_0 : i32, i32
  }
  func.func @transform_5(%arg0: i32) -> (i32, i32) {
    %c0_i32 = arith.constant 0 : i32
    %c0_i32_0 = arith.constant 0 : i32
    %c0_i32_1 = arith.constant 0 : i32
    return %c0_i32, %c0_i32_0 : i32, i32
  }
  func.func @transform_6(%arg0: i32) -> (i32, i32) {
    %c0_i32 = arith.constant 0 : i32
    %c0_i32_0 = arith.constant 0 : i32
    %c0_i32_1 = arith.constant 0 : i32
    return %c0_i32, %c0_i32_0 : i32, i32
  }
  func.func @transform_7(%arg0: i32) -> (i32, i32) {
    %c0_i32 = arith.constant 0 : i32
    %c0_i32_0 = arith.constant 0 : i32
    return %arg0, %c0_i32 : i32, i32
  }
}

</mosaic_0001>

<llo_original>
// kernel: qnetwork_forward.1
$region0: #{qnetwork_forward.1}
  #allocation0 [shape = 'u32[]', space=smem, size = 0x4, offset = 0x4, fixed_abs, tag = 'smem constant byte address 0x4 - core index']
  #allocation1 [shape = 'u32[144,128]{1,0:T(1,128)}', space=vmem, size = 0x12000, scoped, tag = 'internal scratch']
  %s0 = inlined_call_operand.vmem [shape: f32[8,128], index: 0, kind: input, shape index: {}]
  %s1 = inlined_call_operand.hbm [shape: bf16[128,128], index: 1, kind: input, shape index: {}]
  %s2 = inlined_call_operand.hbm [shape: bf16[128,128], index: 2, kind: input, shape index: {}]
  %s3 = inlined_call_operand.hbm [shape: bf16[128,128], index: 3, kind: input, shape index: {}]
  %s4 = inlined_call_operand.hbm [shape: bf16[128,128], index: 4, kind: input, shape index: {}]
  %s5 = inlined_call_operand.vmem [shape: f32[9,128], index: 5, kind: input, shape index: {}]
  %s6 = inlined_call_operand.vmem [shape: f32[1,128], index: 6, kind: input, shape index: {}]
  %s7 = inlined_call_operand.vmem [shape: f32[8,128], index: 7, kind: output, shape index: {}]
  %s8 = sld [smem:[#allocation0]]
  $region54: #{qnetwork_forward.1} parent=0
    _
  %s10 = ssub.s32 1, %s8
  %s11 = scalar_select 0, %s10, %s8
  $region1: #{qnetwork_forward.1} parent=0
    #allocation2 [shape = 'u8[32768]{0}', space=vmem, size = 0x8000, scoped, tag = 'input window, operand 1, single buffered']
    #allocation3 [shape = 's32[1]{0}', space=sflag, size = 0x4, scoped, tag = 'scoped memory for qnetwork_forward.1']
    #allocation4 [shape = 'u8[32768]{0}', space=vmem, size = 0x8000, scoped, tag = 'input window, operand 2, single buffered']
    #allocation5 [shape = 's32[1]{0}', space=sflag, size = 0x4, scoped, tag = 'scoped memory for qnetwork_forward.1']
    #allocation6 [shape = 'u8[32768]{0}', space=vmem, size = 0x8000, scoped, tag = 'input window, operand 3, single buffered']
    #allocation7 [shape = 'u8[32768]{0}', space=vmem, size = 0x8000, scoped, tag = 'input window, operand 4, single buffered']
    #allocation8 [shape = 's32[1]{0}', space=sflag, size = 0x4, scoped, tag = 'scoped memory for qnetwork_forward.1']
    %12 = vsyncpa [#allocation3], 0
    %13 = vsyncpa [#allocation5], 0
    %14 = vsyncpa [#allocation8], 0
    // Predicated region
    $region2: #{qnetwork_forward.1} parent=1 // pred_check
      _
    $region3: #{qnetwork_forward.1} parent=1 // pred_check_branch
      %16 = sbr.rel (0) target = $region5
    $region4: #{qnetwork_forward.1} parent=1 // pred_region
      _
    $region5: #{qnetwork_forward.1} parent=1 // pred_fallthru
      _
    // Predicated region
    $region6: #{qnetwork_forward.1} parent=1 // pred_check
      _
    $region7: #{qnetwork_forward.1} parent=1 // pred_check_branch
      %18 = sbr.rel (0) target = $region9
    $region8: #{qnetwork_forward.1} parent=1 // pred_region
      %s20 = ssub.s32 1024, 1024
      %21 = vsyncadd [#allocation3], %s20
      %s22 = sshll.u32 [#allocation2], 4
      %s23 = int_to_ptr.vmem [resolvable:$true] %s22
      %28 = dma.hbm_to_vmem [thread:$0]  %s1, 1024, %s23, [#allocation3], 64, 64, 4
    $region9: #{qnetwork_forward.1} parent=1 // pred_fallthru
      _
    // Predicated region
    $region10: #{qnetwork_forward.1} parent=1 // pred_check
      _
    $region11: #{qnetwork_forward.1} parent=1 // pred_check_branch
      %30 = sbr.rel (0) target = $region13
    $region12: #{qnetwork_forward.1} parent=1 // pred_region
      %s32 = ssub.s32 1024, 1024
      %33 = vsyncadd [#allocation5], %s32
      %s34 = sshll.u32 [#allocation4], 4
      %s35 = int_to_ptr.vmem [resolvable:$true] %s34
      %40 = dma.hbm_to_vmem [thread:$0]  %s2, 1024, %s35, [#allocation5], 64, 64, 4
    $region13: #{qnetwork_forward.1} parent=1 // pred_fallthru
      _
    // Predicated region
    $region14: #{qnetwork_forward.1} parent=1 // pred_check
      _
    $region15: #{qnetwork_forward.1} parent=1 // pred_check_branch
      %42 = sbr.rel (0) target = $region17
    $region16: #{qnetwork_forward.1} parent=1 // pred_region
      %s44 = ssub.s32 1024, 1024
      %45 = vsyncadd [#allocation5], %s44
      %s46 = sshll.u32 [#allocation6], 4
      %s47 = int_to_ptr.vmem [resolvable:$true] %s46
      %52 = dma.hbm_to_vmem [thread:$0]  %s3, 1024, %s47, [#allocation5], 64, 64, 4
    $region17: #{qnetwork_forward.1} parent=1 // pred_fallthru
      _
    // Predicated region
    $region18: #{qnetwork_forward.1} parent=1 // pred_check
      _
    $region19: #{qnetwork_forward.1} parent=1 // pred_check_branch
      %54 = sbr.rel (0) target = $region21
    $region20: #{qnetwork_forward.1} parent=1 // pred_region
      %s56 = ssub.s32 1024, 1024
      %57 = vsyncadd [#allocation8], %s56
      %s58 = sshll.u32 [#allocation7], 4
      %s59 = int_to_ptr.vmem [resolvable:$true] %s58
      %64 = dma.hbm_to_vmem [thread:$0]  %s4, 1024, %s59, [#allocation8], 64, 64, 4
    $region21: #{qnetwork_forward.1} parent=1 // pred_fallthru
      _
    // Predicated region
    $region22: #{qnetwork_forward.1} parent=1 // pred_check
      _
    $region23: #{qnetwork_forward.1} parent=1 // pred_check_branch
      %66 = sbr.rel (0) target = $region25
    $region24: #{qnetwork_forward.1} parent=1 // pred_region
      _
    $region25: #{qnetwork_forward.1} parent=1 // pred_fallthru
      _
    // Predicated region
    $region26: #{qnetwork_forward.1} parent=1 // pred_check
      _
    $region27: #{qnetwork_forward.1} parent=1 // pred_check_branch
      %68 = sbr.rel (0) target = $region29
    $region28: #{qnetwork_forward.1} parent=1 // pred_region
      _
    $region29: #{qnetwork_forward.1} parent=1 // pred_fallthru
      _
    // Predicated region
    $region30: #{qnetwork_forward.1} parent=1 // pred_check
      _
    $region31: #{qnetwork_forward.1} parent=1 // pred_check_branch
      %70 = sbr.rel (0) target = $region33
    $region32: #{qnetwork_forward.1} parent=1 // pred_region
      %71 = dma.done [#allocation3], 1024
    $region33: #{qnetwork_forward.1} parent=1 // pred_fallthru
      _
    // Predicated region
    $region34: #{qnetwork_forward.1} parent=1 // pred_check
      _
    $region35: #{qnetwork_forward.1} parent=1 // pred_check_branch
      %73 = sbr.rel (0) target = $region37
    $region36: #{qnetwork_forward.1} parent=1 // pred_region
      %74 = dma.done [#allocation5], 1024
    $region37: #{qnetwork_forward.1} parent=1 // pred_fallthru
      _
    // Predicated region
    $region38: #{qnetwork_forward.1} parent=1 // pred_check
      _
    $region39: #{qnetwork_forward.1} parent=1 // pred_check_branch
      %76 = sbr.rel (0) target = $region41
    $region40: #{qnetwork_forward.1} parent=1 // pred_region
      %77 = dma.done [#allocation5], 1024
    $region41: #{qnetwork_forward.1} parent=1 // pred_fallthru
      _
    // Predicated region
    $region42: #{qnetwork_forward.1} parent=1 // pred_check
      _
    $region43: #{qnetwork_forward.1} parent=1 // pred_check_branch
      %79 = sbr.rel (0) target = $region45
    $region44: #{qnetwork_forward.1} parent=1 // pred_region
      %80 = dma.done [#allocation8], 1024
    $region45: #{qnetwork_forward.1} parent=1 // pred_fallthru
      _
    %v82 = vld [vmem:[%s5] sm:$0xff]
    %v83 = vld [vmem:[%s5 + $0x8] sm:$0x1]
    %v84 = vld [vmem:[%s0] sm:$0xff]
    %v85 = vpack.c.bf16 %v84, %v84
    %v86 = vld [vmem:[#allocation2] sm:$0xf]
    %v87 = vld [vmem:[#allocation2 + $0x4] sm:$0xf]
    %v88 = vld [vmem:[#allocation2 + $0x8] sm:$0xf]
    %v89 = vld [vmem:[#allocation2 + $0xc] sm:$0xf]
    %v90 = vld [vmem:[#allocation2 + $0x10] sm:$0xf]
    %v91 = vld [vmem:[#allocation2 + $0x14] sm:$0xf]
    %v92 = vld [vmem:[#allocation2 + $0x18] sm:$0xf]
    %v93 = vld [vmem:[#allocation2 + $0x1c] sm:$0xf]
    %v94 = vld [vmem:[#allocation2 + $0x20] sm:$0xf]
    %v95 = vld [vmem:[#allocation2 + $0x24] sm:$0xf]
    %v96 = vld [vmem:[#allocation2 + $0x28] sm:$0xf]
    %v97 = vld [vmem:[#allocation2 + $0x2c] sm:$0xf]
    %v98 = vld [vmem:[#allocation2 + $0x30] sm:$0xf]
    %v99 = vld [vmem:[#allocation2 + $0x34] sm:$0xf]
    %v100 = vld [vmem:[#allocation2 + $0x38] sm:$0xf]
    %v101 = vld [vmem:[#allocation2 + $0x3c] sm:$0xf]
    %v102 = vlaneseq
    %v103 = vshrl.u32 %v102, 7
    %v104 = vsub.s32 0, %v103
    %v105 = vrot.slane %v82, %v104
    %v122 = vunpack.c.l.b16 %v86
    %v123 = vunpack.c.l.b16 %v87
    %v124 = vunpack.c.l.b16 %v88
    %v125 = vunpack.c.l.b16 %v89
    %v126 = vunpack.c.l.b16 %v90
    %v127 = vunpack.c.l.b16 %v91
    %v128 = vunpack.c.l.b16 %v92
    %v129 = vunpack.c.l.b16 %v93
    %v130 = vunpack.c.l.b16 %v94
    %v131 = vunpack.c.l.b16 %v95
    %v132 = vunpack.c.l.b16 %v96
    %v133 = vunpack.c.l.b16 %v97
    %v134 = vunpack.c.l.b16 %v98
    %v135 = vunpack.c.l.b16 %v99
    %v136 = vunpack.c.l.b16 %v100
    %v137 = vunpack.c.l.b16 %v101
    %v138 = vpack.c.b16 %v123, %v122
    %v139 = vpack.c.b16 %v125, %v124
    %v140 = vpack.c.b16 %v127, %v126
    %v141 = vpack.c.b16 %v129, %v128
    %v142 = vpack.c.b16 %v131, %v130
    %v143 = vpack.c.b16 %v133, %v132
    %v144 = vpack.c.b16 %v135, %v134
    %v145 = vpack.c.b16 %v137, %v136
    %154 = vmatprep.subr.bf16.mxu0 0
    %155 = vmatpush1.bf16.msra.mxu0 %v145
    %156 = vmatprep.subr.bf16.mxu0 0
    %157 = vmatpush1.bf16.msra.mxu0 %v144
    %158 = vmatprep.subr.bf16.mxu0 0
    %159 = vmatpush1.bf16.msra.mxu0 %v143
    %160 = vmatprep.subr.bf16.mxu0 0
    %161 = vmatpush1.bf16.msra.mxu0 %v142
    %162 = vmatprep.subr.bf16.mxu0 0
    %163 = vmatpush1.bf16.msra.mxu0 %v141
    %164 = vmatprep.subr.bf16.mxu0 0
    %165 = vmatpush1.bf16.msra.mxu0 %v140
    %166 = vmatprep.subr.bf16.mxu0 0
    %167 = vmatpush1.bf16.msra.mxu0 %v139
    %168 = vmatprep.subr.bf16.mxu0 0
    %169 = vmatpush1.bf16.msra.mxu0 %v138
    %170 = vmatprep.subr.bf16.mxu0 0
    %171 = vmatpush2.bf16.msra.mxu0 0
    %172 = vmatprep.subr.bf16.mxu0 0
    %173 = vmatpush2.bf16.msra.mxu0 0
    %174 = vmatprep.subr.bf16.mxu0 0
    %175 = vmatpush2.bf16.msra.mxu0 0
    %176 = vmatprep.subr.bf16.mxu0 0
    %177 = vmatpush2.bf16.msra.mxu0 0
    %178 = vmatprep.subr.bf16.mxu0 0
    %179 = vmatpush2.bf16.msra.mxu0 0
    %180 = vmatprep.subr.bf16.mxu0 0
    %181 = vmatpush2.bf16.msra.mxu0 0
    %182 = vmatprep.subr.bf16.mxu0 0
    %183 = vmatpush2.bf16.msra.mxu0 0
    %184 = vmatprep.subr.bf16.mxu0 0
    %185 = vmatpush2.bf16.msra.mxu0 0
    %186 = vmatprep.mubr.bf16.mxu0 0
    %187 = vmatmul.mubr.bf16.gmra.mxu0 %v85
    %v188 = vpop.f32.mrf.mxu0
    %v189 = vadd.f32 %v105, %v188
    %v190 = vpop.f32.mrf.mxu0
    %v191 = vpop.f32.mrf.mxu0
    %v192 = vpop.f32.mrf.mxu0
    %193 = vdwg.mxu0
    %194 = vadd.xlane.f32.xlu0 %v189
    %v195 = vpop.xlane.xlu0 %194
    %v196 = vmul.f32 %v189, %v189
    %197 = vadd.xlane.f32.xlu0 %v196
    %v198 = vpop.xlane.xlu0 %197
    %v199 = vmul.f32 %v195, 0.0078125
    %v200 = vmul.f32 %v198, 0.0078125
    %v201 = vmul.f32 %v199, %v199
    %v202 = vsub.f32 %v200, %v201
    %v203 = vsub.f32 %v189, %v199
    %v204 = vadd.f32 %v202, 1e-05
    %v205 = vrsqrt.pop %v204
    %v206 = vmul.f32 %v203, %v205
    %v207 = vlaneseq
    %v208 = vshrl.u32 %v207, 7
    %v209 = vsub.s32 1, %v208
    %v210 = vrot.slane %v82, %v209
    %v211 = vmul.f32 %v206, %v210
    %v212 = vlaneseq
    %v213 = vshrl.u32 %v212, 7
    %v214 = vsub.s32 2, %v213
    %v215 = vrot.slane %v82, %v214
    %v216 = vadd.f32 %v211, %v215
    %vm217 = vcmp.gt.f32.partialorder %v216, 0.0
    %v218 = vmul.f32 %v216, 0.01
    %v219 = vsel %vm217, %v216, %v218
    %v220 = vpack.c.bf16 %v219, %v219
    %v221 = vld [vmem:[#allocation4] sm:$0xf]
    %v222 = vld [vmem:[#allocation4 + $0x4] sm:$0xf]
    %v223 = vld [vmem:[#allocation4 + $0x8] sm:$0xf]
    %v224 = vld [vmem:[#allocation4 + $0xc] sm:$0xf]
    %v225 = vld [vmem:[#allocation4 + $0x10] sm:$0xf]
    %v226 = vld [vmem:[#allocation4 + $0x14] sm:$0xf]
    %v227 = vld [vmem:[#allocation4 + $0x18] sm:$0xf]
    %v228 = vld [vmem:[#allocation4 + $0x1c] sm:$0xf]
    %v229 = vld [vmem:[#allocation4 + $0x20] sm:$0xf]
    %v230 = vld [vmem:[#allocation4 + $0x24] sm:$0xf]
    %v231 = vld [vmem:[#allocation4 + $0x28] sm:$0xf]
    %v232 = vld [vmem:[#allocation4 + $0x2c] sm:$0xf]
    %v233 = vld [vmem:[#allocation4 + $0x30] sm:$0xf]
    %v234 = vld [vmem:[#allocation4 + $0x34] sm:$0xf]
    %v235 = vld [vmem:[#allocation4 + $0x38] sm:$0xf]
    %v236 = vld [vmem:[#allocation4 + $0x3c] sm:$0xf]
    %v237 = vlaneseq
    %v238 = vshrl.u32 %v237, 7
    %v239 = vsub.s32 3, %v238
    %v240 = vrot.slane %v82, %v239
    %v257 = vunpack.c.l.b16 %v221
    %v258 = vunpack.c.l.b16 %v222
    %v259 = vunpack.c.l.b16 %v223
    %v260 = vunpack.c.l.b16 %v224
    %v261 = vunpack.c.l.b16 %v225
    %v262 = vunpack.c.l.b16 %v226
    %v263 = vunpack.c.l.b16 %v227
    %v264 = vunpack.c.l.b16 %v228
    %v265 = vunpack.c.l.b16 %v229
    %v266 = vunpack.c.l.b16 %v230
    %v267 = vunpack.c.l.b16 %v231
    %v268 = vunpack.c.l.b16 %v232
    %v269 = vunpack.c.l.b16 %v233
    %v270 = vunpack.c.l.b16 %v234
    %v271 = vunpack.c.l.b16 %v235
    %v272 = vunpack.c.l.b16 %v236
    %v273 = vpack.c.b16 %v258, %v257
    %v274 = vpack.c.b16 %v260, %v259
    %v275 = vpack.c.b16 %v262, %v261
    %v276 = vpack.c.b16 %v264, %v263
    %v277 = vpack.c.b16 %v266, %v265
    %v278 = vpack.c.b16 %v268, %v267
    %v279 = vpack.c.b16 %v270, %v269
    %v280 = vpack.c.b16 %v272, %v271
    %289 = vmatprep.subr.bf16.mxu0 0
    %290 = vmatpush1.bf16.msra.mxu0 %v280
    %291 = vmatprep.subr.bf16.mxu0 0
    %292 = vmatpush1.bf16.msra.mxu0 %v279
    %293 = vmatprep.subr.bf16.mxu0 0
    %294 = vmatpush1.bf16.msra.mxu0 %v278
    %295 = vmatprep.subr.bf16.mxu0 0
    %296 = vmatpush1.bf16.msra.mxu0 %v277
    %297 = vmatprep.subr.bf16.mxu0 0
    %298 = vmatpush1.bf16.msra.mxu0 %v276
    %299 = vmatprep.subr.bf16.mxu0 0
    %300 = vmatpush1.bf16.msra.mxu0 %v275
    %301 = vmatprep.subr.bf16.mxu0 0
    %302 = vmatpush1.bf16.msra.mxu0 %v274
    %303 = vmatprep.subr.bf16.mxu0 0
    %304 = vmatpush1.bf16.msra.mxu0 %v273
    %305 = vmatprep.subr.bf16.mxu0 0
    %306 = vmatpush2.bf16.msra.mxu0 0
    %307 = vmatprep.subr.bf16.mxu0 0
    %308 = vmatpush2.bf16.msra.mxu0 0
    %309 = vmatprep.subr.bf16.mxu0 0
    %310 = vmatpush2.bf16.msra.mxu0 0
    %311 = vmatprep.subr.bf16.mxu0 0
    %312 = vmatpush2.bf16.msra.mxu0 0
    %313 = vmatprep.subr.bf16.mxu0 0
    %314 = vmatpush2.bf16.msra.mxu0 0
    %315 = vmatprep.subr.bf16.mxu0 0
    %316 = vmatpush2.bf16.msra.mxu0 0
    %317 = vmatprep.subr.bf16.mxu0 0
    %318 = vmatpush2.bf16.msra.mxu0 0
    %319 = vmatprep.subr.bf16.mxu0 0
    %320 = vmatpush2.bf16.msra.mxu0 0
    %321 = vmatprep.mubr.bf16.mxu0 0
    %322 = vmatmul.mubr.bf16.gmra.mxu0 %v220
    %v323 = vpop.f32.mrf.mxu0
    %v324 = vadd.f32 %v240, %v323
    %v325 = vpop.f32.mrf.mxu0
    %v326 = vpop.f32.mrf.mxu0
    %v327 = vpop.f32.mrf.mxu0
    %328 = vdwg.mxu0
    %329 = vadd.xlane.f32.xlu0 %v324
    %v330 = vpop.xlane.xlu0 %329
    %v331 = vmul.f32 %v324, %v324
    %332 = vadd.xlane.f32.xlu0 %v331
    %v333 = vpop.xlane.xlu0 %332
    %v334 = vmul.f32 %v330, 0.0078125
    %v335 = vmul.f32 %v333, 0.0078125
    %v336 = vmul.f32 %v334, %v334
    %v337 = vsub.f32 %v335, %v336
    %v338 = vsub.f32 %v324, %v334
    %v339 = vadd.f32 %v337, 1e-05
    %v340 = vrsqrt.pop %v339
    %v341 = vmul.f32 %v338, %v340
    %v342 = vlaneseq
    %v343 = vshrl.u32 %v342, 7
    %v344 = vsub.s32 4, %v343
    %v345 = vrot.slane %v82, %v344
    %v346 = vmul.f32 %v341, %v345
    %v347 = vlaneseq
    %v348 = vshrl.u32 %v347, 7
    %v349 = vsub.s32 5, %v348
    %v350 = vrot.slane %v82, %v349
    %v351 = vadd.f32 %v346, %v350
    %vm352 = vcmp.gt.f32.partialorder %v351, 0.0
    %v353 = vmul.f32 %v351, 0.01
    %v354 = vsel %vm352, %v351, %v353
    %v355 = vpack.c.bf16 %v354, %v354
    %v356 = vld [vmem:[#allocation6] sm:$0xf]
    %v357 = vld [vmem:[#allocation6 + $0x4] sm:$0xf]
    %v358 = vld [vmem:[#allocation6 + $0x8] sm:$0xf]
    %v359 = vld [vmem:[#allocation6 + $0xc] sm:$0xf]
    %v360 = vld [vmem:[#allocation6 + $0x10] sm:$0xf]
    %v361 = vld [vmem:[#allocation6 + $0x14] sm:$0xf]
    %v362 = vld [vmem:[#allocation6 + $0x18] sm:$0xf]
    %v363 = vld [vmem:[#allocation6 + $0x1c] sm:$0xf]
    %v364 = vld [vmem:[#allocation6 + $0x20] sm:$0xf]
    %v365 = vld [vmem:[#allocation6 + $0x24] sm:$0xf]
    %v366 = vld [vmem:[#allocation6 + $0x28] sm:$0xf]
    %v367 = vld [vmem:[#allocation6 + $0x2c] sm:$0xf]
    %v368 = vld [vmem:[#allocation6 + $0x30] sm:$0xf]
    %v369 = vld [vmem:[#allocation6 + $0x34] sm:$0xf]
    %v370 = vld [vmem:[#allocation6 + $0x38] sm:$0xf]
    %v371 = vld [vmem:[#allocation6 + $0x3c] sm:$0xf]
    %v372 = vlaneseq
    %v373 = vshrl.u32 %v372, 7
    %v374 = vsub.s32 6, %v373
    %v375 = vrot.slane %v82, %v374
    %v392 = vunpack.c.l.b16 %v356
    %v393 = vunpack.c.l.b16 %v357
    %v394 = vunpack.c.l.b16 %v358
    %v395 = vunpack.c.l.b16 %v359
    %v396 = vunpack.c.l.b16 %v360
    %v397 = vunpack.c.l.b16 %v361
    %v398 = vunpack.c.l.b16 %v362
    %v399 = vunpack.c.l.b16 %v363
    %v400 = vunpack.c.l.b16 %v364
    %v401 = vunpack.c.l.b16 %v365
    %v402 = vunpack.c.l.b16 %v366
    %v403 = vunpack.c.l.b16 %v367
    %v404 = vunpack.c.l.b16 %v368
    %v405 = vunpack.c.l.b16 %v369
    %v406 = vunpack.c.l.b16 %v370
    %v407 = vunpack.c.l.b16 %v371
    %v408 = vpack.c.b16 %v393, %v392
    %v409 = vpack.c.b16 %v395, %v394
    %v410 = vpack.c.b16 %v397, %v396
    %v411 = vpack.c.b16 %v399, %v398
    %v412 = vpack.c.b16 %v401, %v400
    %v413 = vpack.c.b16 %v403, %v402
    %v414 = vpack.c.b16 %v405, %v404
    %v415 = vpack.c.b16 %v407, %v406
    %424 = vmatprep.subr.bf16.mxu0 0
    %425 = vmatpush1.bf16.msra.mxu0 %v415
    %426 = vmatprep.subr.bf16.mxu0 0
    %427 = vmatpush1.bf16.msra.mxu0 %v414
    %428 = vmatprep.subr.bf16.mxu0 0
    %429 = vmatpush1.bf16.msra.mxu0 %v413
    %430 = vmatprep.subr.bf16.mxu0 0
    %431 = vmatpush1.bf16.msra.mxu0 %v412
    %432 = vmatprep.subr.bf16.mxu0 0
    %433 = vmatpush1.bf16.msra.mxu0 %v411
    %434 = vmatprep.subr.bf16.mxu0 0
    %435 = vmatpush1.bf16.msra.mxu0 %v410
    %436 = vmatprep.subr.bf16.mxu0 0
    %437 = vmatpush1.bf16.msra.mxu0 %v409
    %438 = vmatprep.subr.bf16.mxu0 0
    %439 = vmatpush1.bf16.msra.mxu0 %v408
    %440 = vmatprep.subr.bf16.mxu0 0
    %441 = vmatpush2.bf16.msra.mxu0 0
    %442 = vmatprep.subr.bf16.mxu0 0
    %443 = vmatpush2.bf16.msra.mxu0 0
    %444 = vmatprep.subr.bf16.mxu0 0
    %445 = vmatpush2.bf16.msra.mxu0 0
    %446 = vmatprep.subr.bf16.mxu0 0
    %447 = vmatpush2.bf16.msra.mxu0 0
    %448 = vmatprep.subr.bf16.mxu0 0
    %449 = vmatpush2.bf16.msra.mxu0 0
    %450 = vmatprep.subr.bf16.mxu0 0
    %451 = vmatpush2.bf16.msra.mxu0 0
    %452 = vmatprep.subr.bf16.mxu0 0
    %453 = vmatpush2.bf16.msra.mxu0 0
    %454 = vmatprep.subr.bf16.mxu0 0
    %455 = vmatpush2.bf16.msra.mxu0 0
    %456 = vmatprep.mubr.bf16.mxu0 0
    %457 = vmatmul.mubr.bf16.gmra.mxu0 %v355
    %v458 = vpop.f32.mrf.mxu0
    %v459 = vadd.f32 %v375, %v458
    %v460 = vpop.f32.mrf.mxu0
    %v461 = vpop.f32.mrf.mxu0
    %v462 = vpop.f32.mrf.mxu0
    %463 = vdwg.mxu0
    %464 = vadd.xlane.f32.xlu0 %v459
    %v465 = vpop.xlane.xlu0 %464
    %v466 = vmul.f32 %v459, %v459
    %467 = vadd.xlane.f32.xlu0 %v466
    %v468 = vpop.xlane.xlu0 %467
    %v469 = vmul.f32 %v465, 0.0078125
    %v470 = vmul.f32 %v468, 0.0078125
    %v471 = vmul.f32 %v469, %v469
    %v472 = vsub.f32 %v470, %v471
    %v473 = vsub.f32 %v459, %v469
    %v474 = vadd.f32 %v472, 1e-05
    %v475 = vrsqrt.pop %v474
    %v476 = vmul.f32 %v473, %v475
    %v477 = vlaneseq
    %v478 = vshrl.u32 %v477, 7
    %v479 = vsub.s32 7, %v478
    %v480 = vrot.slane %v82, %v479
    %v481 = vmul.f32 %v476, %v480
    %v482 = vlaneseq
    %v483 = vshrl.u32 %v482, 7
    %v484 = vsub.s32 0, %v483
    %v485 = vrot.slane %v83, %v484
    %v486 = vadd.f32 %v481, %v485
    %vm487 = vcmp.gt.f32.partialorder %v486, 0.0
    %v488 = vmul.f32 %v486, 0.01
    %v489 = vsel %vm487, %v486, %v488
    %v490 = vpack.c.bf16 %v489, %v489
    %v491 = vld [vmem:[#allocation7] sm:$0xf]
    %v492 = vld [vmem:[#allocation7 + $0x4] sm:$0xf]
    %v493 = vld [vmem:[#allocation7 + $0x8] sm:$0xf]
    %v494 = vld [vmem:[#allocation7 + $0xc] sm:$0xf]
    %v495 = vld [vmem:[#allocation7 + $0x10] sm:$0xf]
    %v496 = vld [vmem:[#allocation7 + $0x14] sm:$0xf]
    %v497 = vld [vmem:[#allocation7 + $0x18] sm:$0xf]
    %v498 = vld [vmem:[#allocation7 + $0x1c] sm:$0xf]
    %v499 = vld [vmem:[#allocation7 + $0x20] sm:$0xf]
    %v500 = vld [vmem:[#allocation7 + $0x24] sm:$0xf]
    %v501 = vld [vmem:[#allocation7 + $0x28] sm:$0xf]
    %v502 = vld [vmem:[#allocation7 + $0x2c] sm:$0xf]
    %v503 = vld [vmem:[#allocation7 + $0x30] sm:$0xf]
    %v504 = vld [vmem:[#allocation7 + $0x34] sm:$0xf]
    %v505 = vld [vmem:[#allocation7 + $0x38] sm:$0xf]
    %v506 = vld [vmem:[#allocation7 + $0x3c] sm:$0xf]
    %v507 = vld [vmem:[%s6] sm:$0x1]
    %v509 = vlaneseq
    %v510 = vshrl.u32 %v509, 7
    %v511 = vsub.s32 0, %v510
    %v512 = vrot.slane %v507, %v511
    %v530 = vunpack.c.l.b16 %v491
    %v531 = vunpack.c.l.b16 %v492
    %v532 = vunpack.c.l.b16 %v493
    %v533 = vunpack.c.l.b16 %v494
    %v534 = vunpack.c.l.b16 %v495
    %v535 = vunpack.c.l.b16 %v496
    %v536 = vunpack.c.l.b16 %v497
    %v537 = vunpack.c.l.b16 %v498
    %v538 = vunpack.c.l.b16 %v499
    %v539 = vunpack.c.l.b16 %v500
    %v540 = vunpack.c.l.b16 %v501
    %v541 = vunpack.c.l.b16 %v502
    %v542 = vunpack.c.l.b16 %v503
    %v543 = vunpack.c.l.b16 %v504
    %v544 = vunpack.c.l.b16 %v505
    %v545 = vunpack.c.l.b16 %v506
    %v546 = vpack.c.b16 %v531, %v530
    %v547 = vpack.c.b16 %v533, %v532
    %v548 = vpack.c.b16 %v535, %v534
    %v549 = vpack.c.b16 %v537, %v536
    %v550 = vpack.c.b16 %v539, %v538
    %v551 = vpack.c.b16 %v541, %v540
    %v552 = vpack.c.b16 %v543, %v542
    %v553 = vpack.c.b16 %v545, %v544
    %562 = vmatprep.subr.bf16.mxu0 0
    %563 = vmatpush1.bf16.msra.mxu0 %v553
    %564 = vmatprep.subr.bf16.mxu0 0
    %565 = vmatpush1.bf16.msra.mxu0 %v552
    %566 = vmatprep.subr.bf16.mxu0 0
    %567 = vmatpush1.bf16.msra.mxu0 %v551
    %568 = vmatprep.subr.bf16.mxu0 0
    %569 = vmatpush1.bf16.msra.mxu0 %v550
    %570 = vmatprep.subr.bf16.mxu0 0
    %571 = vmatpush1.bf16.msra.mxu0 %v549
    %572 = vmatprep.subr.bf16.mxu0 0
    %573 = vmatpush1.bf16.msra.mxu0 %v548
    %574 = vmatprep.subr.bf16.mxu0 0
    %575 = vmatpush1.bf16.msra.mxu0 %v547
    %576 = vmatprep.subr.bf16.mxu0 0
    %577 = vmatpush1.bf16.msra.mxu0 %v546
    %578 = vmatprep.subr.bf16.mxu0 0
    %579 = vmatpush2.bf16.msra.mxu0 0
    %580 = vmatprep.subr.bf16.mxu0 0
    %581 = vmatpush2.bf16.msra.mxu0 0
    %582 = vmatprep.subr.bf16.mxu0 0
    %583 = vmatpush2.bf16.msra.mxu0 0
    %584 = vmatprep.subr.bf16.mxu0 0
    %585 = vmatpush2.bf16.msra.mxu0 0
    %586 = vmatprep.subr.bf16.mxu0 0
    %587 = vmatpush2.bf16.msra.mxu0 0
    %588 = vmatprep.subr.bf16.mxu0 0
    %589 = vmatpush2.bf16.msra.mxu0 0
    %590 = vmatprep.subr.bf16.mxu0 0
    %591 = vmatpush2.bf16.msra.mxu0 0
    %592 = vmatprep.subr.bf16.mxu0 0
    %593 = vmatpush2.bf16.msra.mxu0 0
    %594 = vmatprep.mubr.bf16.mxu0 0
    %595 = vmatmul.mubr.bf16.gmra.mxu0 %v490
    %v596 = vpop.f32.mrf.mxu0
    %v597 = vadd.f32 %v512, %v596
    %v598 = vpop.f32.mrf.mxu0
    %v599 = vpop.f32.mrf.mxu0
    %v600 = vpop.f32.mrf.mxu0
    %601 = vdwg.mxu0
    %602 = vst [vmem:[%s7] sm:$0xff] %v597
    // Predicated region
    $region46: #{qnetwork_forward.1} parent=1 // pred_check
      _
    $region47: #{qnetwork_forward.1} parent=1 // pred_check_branch
      %604 = sbr.rel (0) target = $region49
    $region48: #{qnetwork_forward.1} parent=1 // pred_region
      _
    $region49: #{qnetwork_forward.1} parent=1 // pred_fallthru
      _
    // Predicated region
    $region50: #{qnetwork_forward.1} parent=1 // pred_check
      _
    $region51: #{qnetwork_forward.1} parent=1 // pred_check_branch
      %606 = sbr.rel (0) target = $region53
    $region52: #{qnetwork_forward.1} parent=1 // pred_region
      _
    $region53: #{qnetwork_forward.1} parent=1 // pred_fallthru
      _
    %607 = vsyncpa [#allocation3], 1
    %608 = vsyncpa [#allocation5], 1
    %609 = vsyncpa [#allocation8], 1

</llo_original>
